<compile_context>
chip_gen: v7x
topology: tpu7x:2x2x1
jax: 0.10.0
libtpu: 0.0.40
codegen_flags: <defaults>
</compile_context>

<pallas_src>
import functools

import jax
import jax.numpy as jnp
from jax.experimental import pallas as pl
from jax.experimental.pallas import tpu as pltpu


def _round_up(x, m):
    return ((x + m - 1) // m) * m


# ---------------------------------------------------------------------------
# Kernel: both MLP trunks as one block-diagonal bf16 matmul chain.
# ---------------------------------------------------------------------------
def _fused_trunk_kernel(x_ref, w1_ref, w2_ref, w3_ref, sel_ref, out_ref, *,
                        emb_half):
    """x_ref   : (TB, 2*obs_dim+1)  = [obs | deltas | 1]          (bf16)
       w1..w3  : block-diagonal fused weights, biases folded via the constant-1
                 carry lane, widths padded to 128-lane multiples   (bf16)
       sel_ref : (emb_half, A_pad) 0/1 selector -> per-action feature sum (MXU)
       out_ref : (TB, A_pad) lane-dense bf16 output slab
    """
    cdt = w1_ref.dtype
    h = jnp.dot(x_ref[...], w1_ref[...], preferred_element_type=jnp.float32)
    h = jnp.maximum(h, 0.0).astype(cdt)
    h = jnp.dot(h, w2_ref[...], preferred_element_type=jnp.float32)
    h = jnp.maximum(h, 0.0).astype(cdt)
    h = jnp.dot(h, w3_ref[...], preferred_element_type=jnp.float32)
    # h = [ob_emb (lanes 0:emb_half) | permuted delta_emb (lanes emb_half:)]
    prod = h[:, :emb_half] * h[:, emb_half:]
    out = jnp.dot(prod.astype(cdt), sel_ref[...],
                  preferred_element_type=jnp.float32)
    out_ref[...] = out.astype(out_ref.dtype)


# ---------------------------------------------------------------------------
# One-time host-side parameter packing (cache the result!).
# ---------------------------------------------------------------------------
def pack_params(params, act_dim, feature_dim, compute_dtype=jnp.bfloat16):
    """Fuse the two trunks into block-diagonal, 128-lane-padded weights with
    biases folded in through a constant-1 carry lane; permute the delta output
    layer into (act, feat) flat order; build the 0/1 per-action selector."""
    (wo1, bo1, wo2, bo2, wo3, bo3,
     wd1, bd1, wd2, bd2, wd3, bd3) = params
    obs_dim, H = wo1.shape
    E = act_dim * feature_dim

    # perm[a*F + f] = f*A + a  (torch reshapes delta embedding to (B, F, A)).
    a_idx = jnp.arange(act_dim)[:, None]
    f_idx = jnp.arange(feature_dim)[None, :]
    perm = (f_idx * act_dim + a_idx).reshape(-1)
    wd3_p = wd3[:, perm]
    bd3_p = bd3[:, perm]

    H2 = 2 * H
    H1P = _round_up(H2 + 1, 128)   # fused hidden width, +1 lane for the carry
    H2P = _round_up(H2 + 1, 128)
    EP = _round_up(E, 128)         # each embedding half padded to 128 lanes

    # Layer 1: input rows = [obs | deltas | 1]; last row = biases + carry.
    w1 = jnp.zeros((2 * obs_dim + 1, H1P), jnp.float32)
    w1 = w1.at[:obs_dim, :H].set(wo1)
    w1 = w1.at[obs_dim:2 * obs_dim, H:H2].set(wd1)
    w1 = w1.at[2 * obs_dim, :H].set(bo1[0])
    w1 = w1.at[2 * obs_dim, H:H2].set(bd1[0])
    w1 = w1.at[2 * obs_dim, H1P - 1].set(1.0)          # keep the constant 1

    # Layer 2: block diagonal + bias row at the carry lane + new carry.
    w2 = jnp.zeros((H1P, H2P), jnp.float32)
    w2 = w2.at[:H, :H].set(wo2)
    w2 = w2.at[H:H2, H:H2].set(wd2)
    w2 = w2.at[H1P - 1, :H].set(bo2[0])
    w2 = w2.at[H1P - 1, H:H2].set(bd2[0])
    w2 = w2.at[H1P - 1, H2P - 1].set(1.0)

    # Layer 3: obs embedding -> lanes [0:E), delta embedding -> [EP:EP+E).
    w3 = jnp.zeros((H2P, 2 * EP), jnp.float32)
    w3 = w3.at[:H, :E].set(wo3)
    w3 = w3.at[H:H2, EP:EP + E].set(wd3_p)
    w3 = w3.at[H2P - 1, :E].set(bo3[0])
    w3 = w3.at[H2P - 1, EP:EP + E].set(bd3_p[0])

    # Lane-dense 0/1 selector: pred[b,a] = sum_f prod[b, a*F+f].
    a_pad = _round_up(act_dim, 128)
    rows = jnp.arange(EP)
    sel = ((rows[:, None] // feature_dim) == jnp.arange(a_pad)[None, :]) \
        & (rows[:, None] < E)

    cdt = compute_dtype
    return (w1.astype(cdt), w2.astype(cdt), w3.astype(cdt), sel.astype(cdt))


# ---------------------------------------------------------------------------
# Forward
# ---------------------------------------------------------------------------
def bilinear_policy_forward(obs, deltas, packed, act_dim, *,
                            batch_tile=1024, vmem_cutoff=2048):
    """obs/deltas: (B, obs_dim).  packed = pack_params(...).  -> (B, A) f32."""
    w1, w2, w3, sel = packed
    B = obs.shape[0]
    EP, a_pad = sel.shape
    cdt = w1.dtype
    out_dtype = jnp.bfloat16   # lane-dense slab; halves the dominant writeback

    ones = jnp.ones((B, 1), cdt)
    x = jnp.concatenate([obs.astype(cdt), deltas.astype(cdt), ones], axis=1)
    xk = x.shape[1]

    kernel = functools.partial(_fused_trunk_kernel, emb_half=EP)

    if B <= vmem_cutoff:
        # No grid: everything resident in VMEM, no pipeline / double buffers.
        vmem = pl.BlockSpec(memory_space=pltpu.MemorySpace.VMEM)
        out = pl.pallas_call(
            kernel,
            out_shape=jax.ShapeDtypeStruct((B, a_pad), out_dtype),
            in_specs=[vmem] * 5,
            out_specs=vmem,
        )(x, w1, w2, w3, sel)
        return out[:, :act_dim].astype(jnp.float32)

    # Batch-streaming path: tile the batch, keep parameters VMEM-resident.
    n_tiles = max(2, pl.cdiv(B, batch_tile))
    if n_tiles % 2:
        n_tiles += 1               # even # of balanced steps -> both v7x TCs busy
    TB = _round_up(pl.cdiv(B, n_tiles), 8)
    Bp = n_tiles * TB
    if Bp != B:
        x = jnp.pad(x, ((0, Bp - B), (0, 0)))

    # Constant-index weight/selector blocks: Mosaic skips re-DMA when the block
    # index does not change between grid steps, so they stay VMEM-resident.
    resident = lambda arr: pl.BlockSpec(arr.shape, lambda i: (0, 0))

    # Raise the scoped-VMEM limit only if a very large tile would exceed the
    # v5e default (16 MiB); never needed at the default batch_tile.
    nbytes = lambda a: a.size * a.dtype.itemsize
    est = (2 * TB * xk * x.dtype.itemsize
           + 2 * TB * a_pad * jnp.dtype(out_dtype).itemsize
           + 2 * (nbytes(w1) + nbytes(w2) + nbytes(w3) + nbytes(sel))
           + (4 << 20))
    cp_kwargs = dict(dimension_semantics=("parallel",))
    if est > (16 << 20):
        cp_kwargs["vmem_limit_bytes"] = int(min(est, 48 << 20))

    out = pl.pallas_call(
        kernel,
        out_shape=jax.ShapeDtypeStruct((Bp, a_pad), out_dtype),
        grid=(n_tiles,),
        in_specs=[pl.BlockSpec((TB, xk), lambda i: (i, 0)),
                  resident(w1), resident(w2), resident(w3), resident(sel)],
        out_specs=pl.BlockSpec((TB, a_pad), lambda i: (i, 0)),
        compiler_params=pltpu.CompilerParams(**cp_kwargs),
    )(x, w1, w2, w3, sel)
    return out[:B, :act_dim].astype(jnp.float32)


# ---------------------------------------------------------------------------
# Reference + test harness
# ---------------------------------------------------------------------------
def _init_linear(key, fan_in, fan_out):
    # torch.nn.Linear default: U(-1/sqrt(fan_in), 1/sqrt(fan_in))
    kw, kb = jax.random.split(key)
    bound = 1.0 / (fan_in ** 0.5)
    w = jax.random.uniform(kw, (fan_in, fan_out), jnp.float32, -bound, bound)
    b = jax.random.uniform(kb, (1, fan_out), jnp.float32, -bound, bound)
    return w, b


def _reference_forward(obs, deltas, params, act_dim, feature_dim):
    (wo1, bo1, wo2, bo2, wo3, bo3,
     wd1, bd1, wd2, bd2, wd3, bd3) = params

    def trunk(x, w1, b1, w2, b2, w3, b3):
        h = jnp.maximum(x @ w1 + b1, 0.0)
        h = jnp.maximum(h @ w2 + b2, 0.0)
        return h @ w3 + b3

    ob = trunk(obs, wo1, bo1, wo2, bo2, wo3, bo3).reshape(-1, act_dim, feature_dim)
    dl = trunk(deltas, wd1, bd1, wd2, bd2, wd3, bd3).reshape(-1, feature_dim, act_dim)
    m = jnp.einsum("baf,bfc->bac", ob, dl)
    return jnp.diagonal(m, axis1=1, axis2=2)


if __name__ == "__main__":
    # Module hyperparameters (small, consistent with the torch module).
    B = 8
    obs_dim = 32
    hidden_dim = 32
    feature_dim = 8
    act_dim = 4

    key = jax.random.PRNGKey(0)
    keys = jax.random.split(key, 10)

    wo1, bo1 = _init_linear(keys[0], obs_dim, hidden_dim)
    wo2, bo2 = _init_linear(keys[1], hidden_dim, hidden_dim)
    wo3, bo3 = _init_linear(keys[2], hidden_dim, feature_dim * act_dim)
    wd1, bd1 = _init_linear(keys[3], obs_dim, hidden_dim)
    wd2, bd2 = _init_linear(keys[4], hidden_dim, hidden_dim)
    wd3, bd3 = _init_linear(keys[5], hidden_dim, feature_dim * act_dim)

    params = (wo1, bo1, wo2, bo2, wo3, bo3,
              wd1, bd1, wd2, bd2, wd3, bd3)

    # Pack / fuse parameters ONCE and reuse for every forward call.
    packed = jax.tree.map(jax.block_until_ready,
                          pack_params(params, act_dim, feature_dim))

    # bf16 MXU inputs (f32 accumulation) -> loosened tolerance vs f32 reference.
    TOL = dict(atol=5e-2, rtol=5e-2)

    # --- small/mid-batch path (no grid, all-resident-in-VMEM) --------------
    fwd_small = jax.jit(lambda o, d: bilinear_policy_forward(
        o, d, packed, act_dim))
    obs = jax.random.normal(keys[6], (B, obs_dim), jnp.float32)
    deltas = jax.random.normal(keys[7], (B, obs_dim), jnp.float32)
    pred = jax.block_until_ready(fwd_small(obs, deltas))
    ref = _reference_forward(obs, deltas, params, act_dim, feature_dim)
    assert pred.shape == (B, act_dim)
    assert jnp.allclose(pred, ref, **TOL), "small-batch mismatch"

    # --- batch-streaming path (parallel grid, even balanced tiles) ---------
    Bbig = 200  # force the gridded path with small tiles to exercise padding
    fwd_stream = jax.jit(lambda o, d: bilinear_policy_forward(
        o, d, packed, act_dim, batch_tile=64, vmem_cutoff=64))
    obs_b = jax.random.normal(keys[8], (Bbig, obs_dim), jnp.float32)
    del_b = jax.random.normal(keys[9], (Bbig, obs_dim), jnp.float32)
    pred_b = jax.block_until_ready(fwd_stream(obs_b, del_b))
    ref_b = _reference_forward(obs_b, del_b, params, act_dim, feature_dim)
    assert pred_b.shape == (Bbig, act_dim)
    assert jnp.allclose(pred_b, ref_b, **TOL), "tiled mismatch"

    print("KERNEL_OK")
</pallas_src>

<mosaic_0001>
module attributes {stable_mosaic.version = 11 : i64} {
  func.func @_fused_trunk_kernel(%arg0: memref<8x65xbf16, #tpu.memory_space<vmem>>, %arg1: memref<65x128xbf16, #tpu.memory_space<vmem>>, %arg2: memref<128x128xbf16, #tpu.memory_space<vmem>>, %arg3: memref<128x256xbf16, #tpu.memory_space<vmem>>, %arg4: memref<128x128xbf16, #tpu.memory_space<vmem>>, %arg5: memref<8x128xbf16, #tpu.memory_space<vmem>>) attributes {dimension_semantics = [], scalar_prefetch = 0 : i64, scratch_operands = 0 : i64, tpu.core_type = #tpu.core_type<tc>} {
    %c0 = arith.constant 0 : index
    %c0_0 = arith.constant 0 : index
    %0 = vector.load %arg0[%c0, %c0_0] : memref<8x65xbf16, #tpu.memory_space<vmem>>, vector<8x65xbf16>
    %c0_1 = arith.constant 0 : index
    %c0_2 = arith.constant 0 : index
    %1 = vector.load %arg1[%c0_1, %c0_2] : memref<65x128xbf16, #tpu.memory_space<vmem>>, vector<65x128xbf16>
    %cst = arith.constant dense<0.000000e+00> : vector<8x128xf32>
    %2 = tpu.matmul %0, %1, %cst {dimension_numbers = #tpu.dot_dimension_numbers<[1], [0], [0], [1], [0, 0, 1, 1], [], []>} : vector<8x65xbf16>, vector<65x128xbf16>, vector<8x128xf32> -> vector<8x128xf32>
    %cst_3 = arith.constant 0.000000e+00 : f32
    %3 = vector.broadcast %cst_3 : f32 to vector<8x128xf32>
    %4 = arith.maximumf %2, %3 : vector<8x128xf32>
    %5 = arith.truncf %4 : vector<8x128xf32> to vector<8x128xbf16>
    %c0_4 = arith.constant 0 : index
    %c0_5 = arith.constant 0 : index
    %6 = vector.load %arg2[%c0_4, %c0_5] : memref<128x128xbf16, #tpu.memory_space<vmem>>, vector<128x128xbf16>
    %cst_6 = arith.constant dense<0.000000e+00> : vector<8x128xf32>
    %7 = tpu.matmul %5, %6, %cst_6 {dimension_numbers = #tpu.dot_dimension_numbers<[1], [0], [0], [1], [0, 0, 1, 1], [], []>} : vector<8x128xbf16>, vector<128x128xbf16>, vector<8x128xf32> -> vector<8x128xf32>
    %cst_7 = arith.constant 0.000000e+00 : f32
    %8 = vector.broadcast %cst_7 : f32 to vector<8x128xf32>
    %9 = arith.maximumf %7, %8 : vector<8x128xf32>
    %10 = arith.truncf %9 : vector<8x128xf32> to vector<8x128xbf16>
    %c0_8 = arith.constant 0 : index
    %c0_9 = arith.constant 0 : index
    %11 = vector.load %arg3[%c0_8, %c0_9] : memref<128x256xbf16, #tpu.memory_space<vmem>>, vector<128x256xbf16>
    %cst_10 = arith.constant dense<0.000000e+00> : vector<8x256xf32>
    %12 = tpu.matmul %10, %11, %cst_10 {dimension_numbers = #tpu.dot_dimension_numbers<[1], [0], [0], [1], [0, 0, 1, 1], [], []>} : vector<8x128xbf16>, vector<128x256xbf16>, vector<8x256xf32> -> vector<8x256xf32>
    %13 = vector.extract_strided_slice %12 {offsets = [0, 0], sizes = [8, 128], strides = [1, 1]} : vector<8x256xf32> to vector<8x128xf32>
    %14 = vector.extract_strided_slice %12 {offsets = [0, 128], sizes = [8, 128], strides = [1, 1]} : vector<8x256xf32> to vector<8x128xf32>
    %15 = arith.mulf %13, %14 : vector<8x128xf32>
    %16 = arith.truncf %15 : vector<8x128xf32> to vector<8x128xbf16>
    %c0_11 = arith.constant 0 : index
    %c0_12 = arith.constant 0 : index
    %17 = vector.load %arg4[%c0_11, %c0_12] : memref<128x128xbf16, #tpu.memory_space<vmem>>, vector<128x128xbf16>
    %cst_13 = arith.constant dense<0.000000e+00> : vector<8x128xf32>
    %18 = tpu.matmul %16, %17, %cst_13 {dimension_numbers = #tpu.dot_dimension_numbers<[1], [0], [0], [1], [0, 0, 1, 1], [], []>} : vector<8x128xbf16>, vector<128x128xbf16>, vector<8x128xf32> -> vector<8x128xf32>
    %19 = arith.truncf %18 : vector<8x128xf32> to vector<8x128xbf16>
    %c0_14 = arith.constant 0 : index
    %c0_15 = arith.constant 0 : index
    %20 = vector.load %arg5[%c0_14, %c0_15] : memref<8x128xbf16, #tpu.memory_space<vmem>>, vector<8x128xbf16>
    tpu.vector_store %arg5[%c0_14, %c0_15], %19 {strides = array<i32>} : memref<8x128xbf16, #tpu.memory_space<vmem>>, vector<8x128xbf16>,
    return
  }
}

</mosaic_0001>

<llo_original>
// kernel: _lambda_.1
$region0: #{_lambda_.1}
  #allocation0 [shape = 'u32[]', space=smem, size = 0x4, offset = 0x4, fixed_abs, tag = 'smem constant byte address 0x4 - core index']
  #allocation1 [shape = 'u32[144,128]{1,0:T(1,128)}', space=vmem, size = 0x12000, scoped, tag = 'internal scratch']
  %s0 = inlined_call_operand.vmem [shape: bf16[8,65], index: 0, kind: input, shape index: {}]
  %s1 = inlined_call_operand.vmem [shape: bf16[65,128], index: 1, kind: input, shape index: {}]
  %s2 = inlined_call_operand.vmem [shape: bf16[128,128], index: 2, kind: input, shape index: {}]
  %s3 = inlined_call_operand.vmem [shape: bf16[128,256], index: 3, kind: input, shape index: {}]
  %s4 = inlined_call_operand.vmem [shape: bf16[128,128], index: 4, kind: input, shape index: {}]
  %s5 = inlined_call_operand.vmem [shape: bf16[8,128], index: 5, kind: output, shape index: {}]
  %s6 = sld [smem:[#allocation0]]
  $region30: #{_lambda_.1} parent=0
    _
  %s8 = ssub.s32 1, %s6
  %s9 = scalar_select 0, %s8, %s6
  // Predicated region
  $region2: #{_lambda_.1} parent=0 // pred_check
    _
  $region3: #{_lambda_.1} parent=0 // pred_check_branch
    %11 = sbr.rel (0) target = $region5
  $region4: #{_lambda_.1} parent=0 // pred_region
    _
  $region5: #{_lambda_.1} parent=0 // pred_fallthru
    _
  // Predicated region
  $region6: #{_lambda_.1} parent=0 // pred_check
    _
  $region7: #{_lambda_.1} parent=0 // pred_check_branch
    %13 = sbr.rel (0) target = $region9
  $region8: #{_lambda_.1} parent=0 // pred_region
    _
  $region9: #{_lambda_.1} parent=0 // pred_fallthru
    _
  // Predicated region
  $region10: #{_lambda_.1} parent=0 // pred_check
    _
  $region11: #{_lambda_.1} parent=0 // pred_check_branch
    %15 = sbr.rel (0) target = $region13
  $region12: #{_lambda_.1} parent=0 // pred_region
    _
  $region13: #{_lambda_.1} parent=0 // pred_fallthru
    _
  // Predicated region
  $region14: #{_lambda_.1} parent=0 // pred_check
    _
  $region15: #{_lambda_.1} parent=0 // pred_check_branch
    %17 = sbr.rel (0) target = $region17
  $region16: #{_lambda_.1} parent=0 // pred_region
    _
  $region17: #{_lambda_.1} parent=0 // pred_fallthru
    _
  // Predicated region
  $region18: #{_lambda_.1} parent=0 // pred_check
    _
  $region19: #{_lambda_.1} parent=0 // pred_check_branch
    %19 = sbr.rel (0) target = $region21
  $region20: #{_lambda_.1} parent=0 // pred_region
    _
  $region21: #{_lambda_.1} parent=0 // pred_fallthru
    _
  %v21 = vld [vmem:[%s0] sm:$0xf]
  %v22 = vld [vmem:[%s1] sm:$0xf]
  %v23 = vld [vmem:[%s1 + $0x4] sm:$0xf]
  %v24 = vld [vmem:[%s1 + $0x8] sm:$0xf]
  %v25 = vld [vmem:[%s1 + $0xc] sm:$0xf]
  %v26 = vld [vmem:[%s1 + $0x10] sm:$0xf]
  %v27 = vld [vmem:[%s1 + $0x14] sm:$0xf]
  %v28 = vld [vmem:[%s1 + $0x18] sm:$0xf]
  %v29 = vld [vmem:[%s1 + $0x1c] sm:$0xf]
  %v30 = vld [vmem:[%s1 + $0x20] sm:$0x1]
  %v40 = vunpack.c.l.b16 %v22
  %v41 = vunpack.c.l.b16 %v23
  %v42 = vunpack.c.l.b16 %v24
  %v43 = vunpack.c.l.b16 %v25
  %v44 = vunpack.c.l.b16 %v26
  %v45 = vunpack.c.l.b16 %v27
  %v46 = vunpack.c.l.b16 %v28
  %v47 = vunpack.c.l.b16 %v29
  %v48 = vunpack.c.l.b16 %v30
  %v49 = vpack.c.b16 %v41, %v40
  %v50 = vpack.c.b16 %v43, %v42
  %v51 = vpack.c.b16 %v45, %v44
  %v52 = vpack.c.b16 %v47, %v46
  %v53 = vpack.c.b16 %v48, %v48
  %vm58 = vcmask 531456
  %v60 = vsel %vm58, %v21, 0
  %vm62 = vcmask 1040384
  %v63 = vsel 0, 4294967295, 65535
  %v64 = vsel %vm62, %v63, 0
  %v66 = vand.u32 %v53, %v64
  %68 = vmatprep.subr.bf16.mxu0 0
  %69 = vmatpush1.bf16.msra.mxu0 %v49
  %70 = vmatprep.subr.bf16.mxu0 0
  %71 = vmatpush1.bf16.msra.mxu0 %v50
  %72 = vmatprep.subr.bf16.mxu0 0
  %73 = vmatpush1.bf16.msra.mxu0 %v51
  %74 = vmatprep.subr.bf16.mxu0 0
  %75 = vmatpush1.bf16.msra.mxu0 %v52
  %76 = vmatprep.subr.bf16.mxu0 0
  %77 = vmatpush1.bf16.msra.mxu0 %v66
  %78 = vmatprep.subr.bf16.mxu0 0
  %79 = vmatpush1.bf16.msra.mxu0 0
  %80 = vmatprep.subr.bf16.mxu0 0
  %81 = vmatpush1.bf16.msra.mxu0 0
  %82 = vmatprep.subr.bf16.mxu0 0
  %83 = vmatpush1.bf16.msra.mxu0 0
  %84 = vmatprep.subr.bf16.mxu0 0
  %85 = vmatpush1.bf16.msra.mxu0 0
  %86 = vmatprep.subr.bf16.mxu0 0
  %87 = vmatpush1.bf16.msra.mxu0 0
  %88 = vmatprep.subr.bf16.mxu0 0
  %89 = vmatpush1.bf16.msra.mxu0 0
  %90 = vmatprep.subr.bf16.mxu0 0
  %91 = vmatpush1.bf16.msra.mxu0 0
  %92 = vmatprep.subr.bf16.mxu0 0
  %93 = vmatpush1.bf16.msra.mxu0 0
  %94 = vmatprep.subr.bf16.mxu0 0
  %95 = vmatpush1.bf16.msra.mxu0 0
  %96 = vmatprep.subr.bf16.mxu0 0
  %97 = vmatpush1.bf16.msra.mxu0 0
  %98 = vmatprep.subr.bf16.mxu0 0
  %99 = vmatpush1.bf16.msra.mxu0 0
  %100 = vmatprep.mubr.bf16.mxu0 0
  %101 = vmatmul.mubr.bf16.gmra.mrb[0].mxu0 %v60
  %v102 = vpop.f32.mrb[0].mxu0
  %v103 = vadd.f32 0.0, %v102
  %v104 = vpop.f32.mrb[0].mxu0
  %v105 = vpop.f32.mrb[0].mxu0
  %v106 = vpop.f32.mrb[0].mxu0
  %107 = vdwg.mxu0
  %v108 = vmax.f32 %v103, 0.0
  %v109 = vpack.c.bf16 %v108, %v108
  %v110 = vld [vmem:[%s2] sm:$0xf]
  %v111 = vld [vmem:[%s2 + $0x4] sm:$0xf]
  %v112 = vld [vmem:[%s2 + $0x8] sm:$0xf]
  %v113 = vld [vmem:[%s2 + $0xc] sm:$0xf]
  %v114 = vld [vmem:[%s2 + $0x10] sm:$0xf]
  %v115 = vld [vmem:[%s2 + $0x14] sm:$0xf]
  %v116 = vld [vmem:[%s2 + $0x18] sm:$0xf]
  %v117 = vld [vmem:[%s2 + $0x1c] sm:$0xf]
  %v118 = vld [vmem:[%s2 + $0x20] sm:$0xf]
  %v119 = vld [vmem:[%s2 + $0x24] sm:$0xf]
  %v120 = vld [vmem:[%s2 + $0x28] sm:$0xf]
  %v121 = vld [vmem:[%s2 + $0x2c] sm:$0xf]
  %v122 = vld [vmem:[%s2 + $0x30] sm:$0xf]
  %v123 = vld [vmem:[%s2 + $0x34] sm:$0xf]
  %v124 = vld [vmem:[%s2 + $0x38] sm:$0xf]
  %v125 = vld [vmem:[%s2 + $0x3c] sm:$0xf]
  %v142 = vunpack.c.l.b16 %v110
  %v143 = vunpack.c.l.b16 %v111
  %v144 = vunpack.c.l.b16 %v112
  %v145 = vunpack.c.l.b16 %v113
  %v146 = vunpack.c.l.b16 %v114
  %v147 = vunpack.c.l.b16 %v115
  %v148 = vunpack.c.l.b16 %v116
  %v149 = vunpack.c.l.b16 %v117
  %v150 = vunpack.c.l.b16 %v118
  %v151 = vunpack.c.l.b16 %v119
  %v152 = vunpack.c.l.b16 %v120
  %v153 = vunpack.c.l.b16 %v121
  %v154 = vunpack.c.l.b16 %v122
  %v155 = vunpack.c.l.b16 %v123
  %v156 = vunpack.c.l.b16 %v124
  %v157 = vunpack.c.l.b16 %v125
  %v158 = vpack.c.b16 %v143, %v142
  %v159 = vpack.c.b16 %v145, %v144
  %v160 = vpack.c.b16 %v147, %v146
  %v161 = vpack.c.b16 %v149, %v148
  %v162 = vpack.c.b16 %v151, %v150
  %v163 = vpack.c.b16 %v153, %v152
  %v164 = vpack.c.b16 %v155, %v154
  %v165 = vpack.c.b16 %v157, %v156
  %174 = vmatprep.subr.bf16.mxu0 0
  %175 = vmatpush1.bf16.msra.mxu0 %v158
  %176 = vmatprep.subr.bf16.mxu0 0
  %177 = vmatpush1.bf16.msra.mxu0 %v159
  %178 = vmatprep.subr.bf16.mxu0 0
  %179 = vmatpush1.bf16.msra.mxu0 %v160
  %180 = vmatprep.subr.bf16.mxu0 0
  %181 = vmatpush1.bf16.msra.mxu0 %v161
  %182 = vmatprep.subr.bf16.mxu0 0
  %183 = vmatpush1.bf16.msra.mxu0 %v162
  %184 = vmatprep.subr.bf16.mxu0 0
  %185 = vmatpush1.bf16.msra.mxu0 %v163
  %186 = vmatprep.subr.bf16.mxu0 0
  %187 = vmatpush1.bf16.msra.mxu0 %v164
  %188 = vmatprep.subr.bf16.mxu0 0
  %189 = vmatpush1.bf16.msra.mxu0 %v165
  %190 = vmatprep.subr.bf16.mxu0 0
  %191 = vmatpush1.bf16.msra.mxu0 0
  %192 = vmatprep.subr.bf16.mxu0 0
  %193 = vmatpush1.bf16.msra.mxu0 0
  %194 = vmatprep.subr.bf16.mxu0 0
  %195 = vmatpush1.bf16.msra.mxu0 0
  %196 = vmatprep.subr.bf16.mxu0 0
  %197 = vmatpush1.bf16.msra.mxu0 0
  %198 = vmatprep.subr.bf16.mxu0 0
  %199 = vmatpush1.bf16.msra.mxu0 0
  %200 = vmatprep.subr.bf16.mxu0 0
  %201 = vmatpush1.bf16.msra.mxu0 0
  %202 = vmatprep.subr.bf16.mxu0 0
  %203 = vmatpush1.bf16.msra.mxu0 0
  %204 = vmatprep.subr.bf16.mxu0 0
  %205 = vmatpush1.bf16.msra.mxu0 0
  %206 = vmatprep.mubr.bf16.mxu0 0
  %207 = vmatmul.mubr.bf16.gmra.mrb[0].mxu0 %v109
  %v208 = vpop.f32.mrb[0].mxu0
  %v209 = vadd.f32 0.0, %v208
  %v210 = vpop.f32.mrb[0].mxu0
  %v211 = vpop.f32.mrb[0].mxu0
  %v212 = vpop.f32.mrb[0].mxu0
  %213 = vdwg.mxu0
  %v214 = vmax.f32 %v209, 0.0
  %v215 = vpack.c.bf16 %v214, %v214
  %v216 = vld [vmem:[%s3] sm:$0xff]
  %v217 = vld [vmem:[%s3 + $0x8] sm:$0xff]
  %v218 = vld [vmem:[%s3 + $0x10] sm:$0xff]
  %v219 = vld [vmem:[%s3 + $0x18] sm:$0xff]
  %v220 = vld [vmem:[%s3 + $0x20] sm:$0xff]
  %v221 = vld [vmem:[%s3 + $0x28] sm:$0xff]
  %v222 = vld [vmem:[%s3 + $0x30] sm:$0xff]
  %v223 = vld [vmem:[%s3 + $0x38] sm:$0xff]
  %v224 = vld [vmem:[%s3 + $0x40] sm:$0xff]
  %v225 = vld [vmem:[%s3 + $0x48] sm:$0xff]
  %v226 = vld [vmem:[%s3 + $0x50] sm:$0xff]
  %v227 = vld [vmem:[%s3 + $0x58] sm:$0xff]
  %v228 = vld [vmem:[%s3 + $0x60] sm:$0xff]
  %v229 = vld [vmem:[%s3 + $0x68] sm:$0xff]
  %v230 = vld [vmem:[%s3 + $0x70] sm:$0xff]
  %v231 = vld [vmem:[%s3 + $0x78] sm:$0xff]
  %v248 = vunpack.c.l.b16 %v216
  %v249 = vunpack.c.h.b16 %v216
  %v250 = vunpack.c.l.b16 %v217
  %v251 = vunpack.c.h.b16 %v217
  %v252 = vunpack.c.l.b16 %v218
  %v253 = vunpack.c.h.b16 %v218
  %v254 = vunpack.c.l.b16 %v219
  %v255 = vunpack.c.h.b16 %v219
  %v256 = vunpack.c.l.b16 %v220
  %v257 = vunpack.c.h.b16 %v220
  %v258 = vunpack.c.l.b16 %v221
  %v259 = vunpack.c.h.b16 %v221
  %v260 = vunpack.c.l.b16 %v222
  %v261 = vunpack.c.h.b16 %v222
  %v262 = vunpack.c.l.b16 %v223
  %v263 = vunpack.c.h.b16 %v223
  %v264 = vunpack.c.l.b16 %v224
  %v265 = vunpack.c.h.b16 %v224
  %v266 = vunpack.c.l.b16 %v225
  %v267 = vunpack.c.h.b16 %v225
  %v268 = vunpack.c.l.b16 %v226
  %v269 = vunpack.c.h.b16 %v226
  %v270 = vunpack.c.l.b16 %v227
  %v271 = vunpack.c.h.b16 %v227
  %v272 = vunpack.c.l.b16 %v228
  %v273 = vunpack.c.h.b16 %v228
  %v274 = vunpack.c.l.b16 %v229
  %v275 = vunpack.c.h.b16 %v229
  %v276 = vunpack.c.l.b16 %v230
  %v277 = vunpack.c.h.b16 %v230
  %v278 = vunpack.c.l.b16 %v231
  %v279 = vunpack.c.h.b16 %v231
  %v280 = vpack.c.b16 %v250, %v248
  %v281 = vpack.c.b16 %v251, %v249
  %v282 = vpack.c.b16 %v254, %v252
  %v283 = vpack.c.b16 %v255, %v253
  %v284 = vpack.c.b16 %v258, %v256
  %v285 = vpack.c.b16 %v259, %v257
  %v286 = vpack.c.b16 %v262, %v260
  %v287 = vpack.c.b16 %v263, %v261
  %v288 = vpack.c.b16 %v266, %v264
  %v289 = vpack.c.b16 %v267, %v265
  %v290 = vpack.c.b16 %v270, %v268
  %v291 = vpack.c.b16 %v271, %v269
  %v292 = vpack.c.b16 %v274, %v272
  %v293 = vpack.c.b16 %v275, %v273
  %v294 = vpack.c.b16 %v278, %v276
  %v295 = vpack.c.b16 %v279, %v277
  %312 = vmatprep.subr.bf16.mxu0 %v281
  %313 = vmatpush1.bf16.msra.mxu0 %v280
  %314 = vmatprep.subr.bf16.mxu0 %v283
  %315 = vmatpush1.bf16.msra.mxu0 %v282
  %316 = vmatprep.subr.bf16.mxu0 %v285
  %317 = vmatpush1.bf16.msra.mxu0 %v284
  %318 = vmatprep.subr.bf16.mxu0 %v287
  %319 = vmatpush1.bf16.msra.mxu0 %v286
  %320 = vmatprep.subr.bf16.mxu0 %v289
  %321 = vmatpush1.bf16.msra.mxu0 %v288
  %322 = vmatprep.subr.bf16.mxu0 %v291
  %323 = vmatpush1.bf16.msra.mxu0 %v290
  %324 = vmatprep.subr.bf16.mxu0 %v293
  %325 = vmatpush1.bf16.msra.mxu0 %v292
  %326 = vmatprep.subr.bf16.mxu0 %v295
  %327 = vmatpush1.bf16.msra.mxu0 %v294
  %328 = vmatprep.subr.bf16.mxu0 0
  %329 = vmatpush1.bf16.msra.mxu0 0
  %330 = vmatprep.subr.bf16.mxu0 0
  %331 = vmatpush1.bf16.msra.mxu0 0
  %332 = vmatprep.subr.bf16.mxu0 0
  %333 = vmatpush1.bf16.msra.mxu0 0
  %334 = vmatprep.subr.bf16.mxu0 0
  %335 = vmatpush1.bf16.msra.mxu0 0
  %336 = vmatprep.subr.bf16.mxu0 0
  %337 = vmatpush1.bf16.msra.mxu0 0
  %338 = vmatprep.subr.bf16.mxu0 0
  %339 = vmatpush1.bf16.msra.mxu0 0
  %340 = vmatprep.subr.bf16.mxu0 0
  %341 = vmatpush1.bf16.msra.mxu0 0
  %342 = vmatprep.subr.bf16.mxu0 0
  %343 = vmatpush1.bf16.msra.mxu0 0
  %344 = vmatprep.mubr.bf16.mxu0 0
  %345 = vmatmul.mubr.bf16.gmra.mrb[0].mxu0 %v215
  %v346 = vpop.f32.mrb[0].mxu0
  %v347 = vadd.f32 0.0, %v346
  %v348 = vpop.f32.mrb[0].mxu0
  %v349 = vadd.f32 0.0, %v348
  %v350 = vpop.f32.mrb[0].mxu0
  %v351 = vpop.f32.mrb[0].mxu0
  %352 = vdwg.mxu0
  %v353 = vmul.f32 %v347, %v349
  %v354 = vpack.c.bf16 %v353, %v353
  %v355 = vld [vmem:[%s4] sm:$0xf]
  %v356 = vld [vmem:[%s4 + $0x4] sm:$0xf]
  %v357 = vld [vmem:[%s4 + $0x8] sm:$0xf]
  %v358 = vld [vmem:[%s4 + $0xc] sm:$0xf]
  %v359 = vld [vmem:[%s4 + $0x10] sm:$0xf]
  %v360 = vld [vmem:[%s4 + $0x14] sm:$0xf]
  %v361 = vld [vmem:[%s4 + $0x18] sm:$0xf]
  %v362 = vld [vmem:[%s4 + $0x1c] sm:$0xf]
  %v363 = vld [vmem:[%s4 + $0x20] sm:$0xf]
  %v364 = vld [vmem:[%s4 + $0x24] sm:$0xf]
  %v365 = vld [vmem:[%s4 + $0x28] sm:$0xf]
  %v366 = vld [vmem:[%s4 + $0x2c] sm:$0xf]
  %v367 = vld [vmem:[%s4 + $0x30] sm:$0xf]
  %v368 = vld [vmem:[%s4 + $0x34] sm:$0xf]
  %v369 = vld [vmem:[%s4 + $0x38] sm:$0xf]
  %v370 = vld [vmem:[%s4 + $0x3c] sm:$0xf]
  %v387 = vunpack.c.l.b16 %v355
  %v388 = vunpack.c.l.b16 %v356
  %v389 = vunpack.c.l.b16 %v357
  %v390 = vunpack.c.l.b16 %v358
  %v391 = vunpack.c.l.b16 %v359
  %v392 = vunpack.c.l.b16 %v360
  %v393 = vunpack.c.l.b16 %v361
  %v394 = vunpack.c.l.b16 %v362
  %v395 = vunpack.c.l.b16 %v363
  %v396 = vunpack.c.l.b16 %v364
  %v397 = vunpack.c.l.b16 %v365
  %v398 = vunpack.c.l.b16 %v366
  %v399 = vunpack.c.l.b16 %v367
  %v400 = vunpack.c.l.b16 %v368
  %v401 = vunpack.c.l.b16 %v369
  %v402 = vunpack.c.l.b16 %v370
  %v403 = vpack.c.b16 %v388, %v387
  %v404 = vpack.c.b16 %v390, %v389
  %v405 = vpack.c.b16 %v392, %v391
  %v406 = vpack.c.b16 %v394, %v393
  %v407 = vpack.c.b16 %v396, %v395
  %v408 = vpack.c.b16 %v398, %v397
  %v409 = vpack.c.b16 %v400, %v399
  %v410 = vpack.c.b16 %v402, %v401
  %419 = vmatprep.subr.bf16.mxu0 0
  %420 = vmatpush1.bf16.msra.mxu0 %v403
  %421 = vmatprep.subr.bf16.mxu0 0
  %422 = vmatpush1.bf16.msra.mxu0 %v404
  %423 = vmatprep.subr.bf16.mxu0 0
  %424 = vmatpush1.bf16.msra.mxu0 %v405
  %425 = vmatprep.subr.bf16.mxu0 0
  %426 = vmatpush1.bf16.msra.mxu0 %v406
  %427 = vmatprep.subr.bf16.mxu0 0
  %428 = vmatpush1.bf16.msra.mxu0 %v407
  %429 = vmatprep.subr.bf16.mxu0 0
  %430 = vmatpush1.bf16.msra.mxu0 %v408
  %431 = vmatprep.subr.bf16.mxu0 0
  %432 = vmatpush1.bf16.msra.mxu0 %v409
  %433 = vmatprep.subr.bf16.mxu0 0
  %434 = vmatpush1.bf16.msra.mxu0 %v410
  %435 = vmatprep.subr.bf16.mxu0 0
  %436 = vmatpush1.bf16.msra.mxu0 0
  %437 = vmatprep.subr.bf16.mxu0 0
  %438 = vmatpush1.bf16.msra.mxu0 0
  %439 = vmatprep.subr.bf16.mxu0 0
  %440 = vmatpush1.bf16.msra.mxu0 0
  %441 = vmatprep.subr.bf16.mxu0 0
  %442 = vmatpush1.bf16.msra.mxu0 0
  %443 = vmatprep.subr.bf16.mxu0 0
  %444 = vmatpush1.bf16.msra.mxu0 0
  %445 = vmatprep.subr.bf16.mxu0 0
  %446 = vmatpush1.bf16.msra.mxu0 0
  %447 = vmatprep.subr.bf16.mxu0 0
  %448 = vmatpush1.bf16.msra.mxu0 0
  %449 = vmatprep.subr.bf16.mxu0 0
  %450 = vmatpush1.bf16.msra.mxu0 0
  %451 = vmatprep.mubr.bf16.mxu0 0
  %452 = vmatmul.mubr.bf16.gmra.mrb[0].mxu0 %v354
  %v453 = vpop.f32.mrb[0].mxu0
  %v454 = vadd.f32 0.0, %v453
  %v455 = vpop.f32.mrb[0].mxu0
  %v456 = vpop.f32.mrb[0].mxu0
  %v457 = vpop.f32.mrb[0].mxu0
  %458 = vdwg.mxu0
  %v459 = vpack.c.bf16 %v454, %v454
  %460 = vst [vmem:[%s5] sm:$0xf] %v459
  // Predicated region
  $region22: #{_lambda_.1} parent=0 // pred_check
    _
  $region23: #{_lambda_.1} parent=0 // pred_check_branch
    %462 = sbr.rel (0) target = $region25
  $region24: #{_lambda_.1} parent=0 // pred_region
    _
  $region25: #{_lambda_.1} parent=0 // pred_fallthru
    _
  // Predicated region
  $region26: #{_lambda_.1} parent=0 // pred_check
    _
  $region27: #{_lambda_.1} parent=0 // pred_check_branch
    %464 = sbr.rel (0) target = $region29
  $region28: #{_lambda_.1} parent=0 // pred_region
    _
  $region29: #{_lambda_.1} parent=0 // pred_fallthru
    _

</llo_original>
